<compile_context>
chip_gen: v5e
topology: v5e:2x2
jax: 0.10.0
libtpu: 0.0.40
codegen_flags: <defaults>
</compile_context>

<pallas_src>
from functools import partial

import jax
import jax.numpy as jnp
from jax import lax
from jax.experimental import pallas as pl
from jax.experimental.pallas import tpu as pltpu

LANE = 128


def mlp_sigmoid_kernel(x_ref, w1_ref, b1_ref, w2_ref, b2_ref, o_ref):
    # x_ref : (TB, IN)      bf16   -- streamed per grid step
    # w1_ref: (IN, HP)      bf16   -- VMEM-resident (constant index map)
    # b1_ref: (1, HP)       f32
    # w2_ref: (8, HP)       f32    -- row 0 holds the real head weights, rows 1..7 zero
    # b2_ref: (1, 1)        f32
    # o_ref : (1, TB)       f32    -- batch on the lane axis
    h = jnp.dot(x_ref[...], w1_ref[...], preferred_element_type=jnp.float32)
    h = jnp.maximum(h + b1_ref[...], 0.0)                       # (TB, HP) f32, VPU

    # Head: contract over the hidden (last) dim of both operands -> (8, TB);
    # only row 0 is meaningful (rows 1..7 of w2 are zero padding).
    out8 = lax.dot_general(w2_ref[...], h, (((1,), (1,)), ((), ())),
                           preferred_element_type=jnp.float32)  # (8, TB)
    row = out8[0:1, :] + b2_ref[...]                            # (1, TB)

    # sigmoid(z) = 1 / (1 + exp(-z)); exp + approx reciprocal both live on the EUP slot.
    o_ref[...] = pl.reciprocal(1.0 + jnp.exp(-row), approx=True).astype(o_ref.dtype)


@partial(jax.jit, static_argnames=("block_batch",))
def neural_net1_forward(x, w1, b1, w2, b2, *, block_batch=2048):
    """x: [B, input_size] f32; w1: [input_size, hidden]; b1: [1, hidden];
    w2: [hidden, 1]; b2: [1, 1]. Returns sigmoid probabilities [B, 1] f32."""
    B, input_size = x.shape
    hidden = w1.shape[0] and w1.shape[1]

    # --- pad the hidden dim to a full 128 lanes (weights only; free in HBM terms) ---
    h_pad = pl.cdiv(max(hidden, 1), LANE) * LANE
    w1_p = jnp.zeros((input_size, h_pad), jnp.float32).at[:, :hidden].set(w1)
    b1_p = jnp.zeros((1, h_pad), jnp.float32).at[:, :hidden].set(b1)
    # Head as a sublane-padded row block (8, h_pad); row 0 = real weights.
    w2_p = jnp.zeros((8, h_pad), jnp.float32).at[0, :hidden].set(w2[:, 0])
    b2_p = b2.astype(jnp.float32).reshape(1, 1)

    # --- batch tile: multiple of 128 so the (1, TB) output store is full-lane ---
    TB = min(block_batch, max(pl.cdiv(B, LANE) * LANE, LANE))
    TB = pl.cdiv(TB, LANE) * LANE
    B_pad = pl.cdiv(B, TB) * TB
    if B_pad != B:
        x = jnp.pad(x, ((0, B_pad - B), (0, 0)))

    # bf16 operands for the big matmul (halves x HBM traffic); f32 accumulation.
    x_bf = x.astype(jnp.bfloat16)
    w1_bf = w1_p.astype(jnp.bfloat16)

    grid = (B_pad // TB,)
    out = pl.pallas_call(
        mlp_sigmoid_kernel,
        out_shape=jax.ShapeDtypeStruct((1, B_pad), jnp.float32),
        grid=grid,
        in_specs=[
            pl.BlockSpec((TB, input_size), lambda i: (i, 0)),   # streamed batch tile
            pl.BlockSpec(w1_bf.shape, lambda i: (0, 0)),        # VMEM-resident
            pl.BlockSpec(b1_p.shape, lambda i: (0, 0)),         # VMEM-resident
            pl.BlockSpec(w2_p.shape, lambda i: (0, 0)),         # VMEM-resident
            pl.BlockSpec(b2_p.shape, lambda i: (0, 0)),         # VMEM-resident
        ],
        # Batch lives on the lane axis of a single output row -> 4 B per batch row.
        out_specs=pl.BlockSpec((1, TB), lambda i: (0, i)),
        compiler_params=pltpu.CompilerParams(
            dimension_semantics=("parallel",)),                 # 2 TCs on v7x
    )(x_bf, w1_bf, b1_p, w2_p, b2_p)

    # Drop padded batch entries and restore the [B, 1] column shape.
    return out[0, :B].reshape(B, 1)


if __name__ == "__main__":
    # Small shapes consistent with Neuralnet1(input_size, hidden_size): out_dim = 1.
    batch, input_size, hidden_size = 16, 32, 32

    key = jax.random.PRNGKey(0)
    kx, k1, k2, k3, k4 = jax.random.split(key, 5)

    x = jax.random.normal(kx, (batch, input_size), dtype=jnp.float32)
    w1 = jax.random.normal(k1, (input_size, hidden_size), dtype=jnp.float32) * 0.1
    b1 = jax.random.normal(k2, (1, hidden_size), dtype=jnp.float32) * 0.1
    w2 = jax.random.normal(k3, (hidden_size, 1), dtype=jnp.float32) * 0.1
    b2 = jax.random.normal(k4, (1, 1), dtype=jnp.float32) * 0.1

    out = neural_net1_forward(x, w1, b1, w2, b2)
    jax.block_until_ready(out)

    # Plain-JAX reference (same semantics as the PyTorch forward, f32 everywhere).
    ref = jax.nn.sigmoid(jnp.maximum(x @ w1 + b1, 0.0) @ w2 + b2)
    assert out.shape == (batch, 1)
    # bf16 operands for the first matmul -> allow ~1e-2 deviation vs. the f32 reference.
    assert jnp.allclose(out, ref, atol=1e-2, rtol=1e-2), (
        float(jnp.max(jnp.abs(out - ref))))

    print("KERNEL_OK")
</pallas_src>

<mosaic_0001>
module attributes {stable_mosaic.version = 11 : i64} {
  func.func @mlp_sigmoid_kernel(%arg0: i32, %arg1: memref<128x32xbf16, #tpu.memory_space<vmem>>, %arg2: memref<32x128xbf16, #tpu.memory_space<vmem>>, %arg3: memref<1x128xf32, #tpu.memory_space<vmem>>, %arg4: memref<8x128xf32, #tpu.memory_space<vmem>>, %arg5: memref<1x1xf32, #tpu.memory_space<vmem>>, %arg6: memref<1x128xf32, #tpu.memory_space<vmem>>) attributes {dimension_semantics = [#tpu.dimension_semantics<parallel>], iteration_bounds = array<i64: 1>, scalar_prefetch = 0 : i64, scratch_operands = 0 : i64, tpu.core_type = #tpu.core_type<tc>, window_params = [{transform_indices = @transform_0, window_bounds = array<i64: 128, 32>}, {pipeline_mode = #tpu.pipeline_mode<synchronous>, transform_indices = @transform_1, window_bounds = array<i64: 32, 128>}, {pipeline_mode = #tpu.pipeline_mode<synchronous>, transform_indices = @transform_2, window_bounds = array<i64: 1, 128>}, {pipeline_mode = #tpu.pipeline_mode<synchronous>, transform_indices = @transform_3, window_bounds = array<i64: 8, 128>}, {pipeline_mode = #tpu.pipeline_mode<synchronous>, transform_indices = @transform_4, window_bounds = array<i64: 1, 1>}, {transform_indices = @transform_5, window_bounds = array<i64: 1, 128>}]} {
    %c0 = arith.constant 0 : index
    %c0_0 = arith.constant 0 : index
    %0 = vector.load %arg1[%c0, %c0_0] : memref<128x32xbf16, #tpu.memory_space<vmem>>, vector<128x32xbf16>
    %c0_1 = arith.constant 0 : index
    %c0_2 = arith.constant 0 : index
    %1 = vector.load %arg2[%c0_1, %c0_2] : memref<32x128xbf16, #tpu.memory_space<vmem>>, vector<32x128xbf16>
    %cst = arith.constant dense<0.000000e+00> : vector<128x128xf32>
    %2 = tpu.matmul %0, %1, %cst {dimension_numbers = #tpu.dot_dimension_numbers<[1], [0], [0], [1], [0, 0, 1, 1], [], []>} : vector<128x32xbf16>, vector<32x128xbf16>, vector<128x128xf32> -> vector<128x128xf32>
    %c0_3 = arith.constant 0 : index
    %c0_4 = arith.constant 0 : index
    %3 = vector.load %arg3[%c0_3, %c0_4] : memref<1x128xf32, #tpu.memory_space<vmem>>, vector<1x128xf32>
    %4 = vector.broadcast %3 : vector<1x128xf32> to vector<128x128xf32>
    %5 = arith.addf %2, %4 : vector<128x128xf32>
    %cst_5 = arith.constant 0.000000e+00 : f32
    %6 = vector.broadcast %cst_5 : f32 to vector<128x128xf32>
    %7 = arith.maximumf %5, %6 : vector<128x128xf32>
    %c0_6 = arith.constant 0 : index
    %c0_7 = arith.constant 0 : index
    %8 = vector.load %arg4[%c0_6, %c0_7] : memref<8x128xf32, #tpu.memory_space<vmem>>, vector<8x128xf32>
    %cst_8 = arith.constant dense<0.000000e+00> : vector<8x128xf32>
    %9 = tpu.matmul %8, %7, %cst_8 {dimension_numbers = #tpu.dot_dimension_numbers<[1], [1], [0], [0], [0, 0, 1, 0], [], []>} : vector<8x128xf32>, vector<128x128xf32>, vector<8x128xf32> -> vector<8x128xf32>
    %10 = vector.extract_strided_slice %9 {offsets = [0, 0], sizes = [1, 128], strides = [1, 1]} : vector<8x128xf32> to vector<1x128xf32>
    %c0_9 = arith.constant 0 : index
    %c0_10 = arith.constant 0 : index
    %11 = vector.load %arg5[%c0_9, %c0_10] : memref<1x1xf32, #tpu.memory_space<vmem>>, vector<1x1xf32>
    %12 = vector.broadcast %11 : vector<1x1xf32> to vector<1x128xf32>
    %13 = arith.addf %10, %12 : vector<1x128xf32>
    %cst_11 = arith.constant 0.000000e+00 : f32
    %14 = vector.broadcast %cst_11 : f32 to vector<1x128xf32>
    %15 = arith.subf %14, %13 : vector<1x128xf32>
    %16 = math.exp %15 : vector<1x128xf32>
    %cst_12 = arith.constant 1.000000e+00 : f32
    %17 = vector.broadcast %cst_12 : f32 to vector<1x128xf32>
    %18 = arith.addf %17, %16 : vector<1x128xf32>
    %19 = tpu.reciprocal %18 {approx = true} : vector<1x128xf32> -> vector<1x128xf32>
    %c0_13 = arith.constant 0 : index
    %c0_14 = arith.constant 0 : index
    %20 = vector.load %arg6[%c0_13, %c0_14] : memref<1x128xf32, #tpu.memory_space<vmem>>, vector<1x128xf32>
    tpu.vector_store %arg6[%c0_13, %c0_14], %19 {strides = array<i32>} : memref<1x128xf32, #tpu.memory_space<vmem>>, vector<1x128xf32>,
    return
  }
  func.func @transform_0(%arg0: i32) -> (i32, i32) {
    %c0_i32 = arith.constant 0 : i32
    %c0_i32_0 = arith.constant 0 : i32
    return %arg0, %c0_i32 : i32, i32
  }
  func.func @transform_1(%arg0: i32) -> (i32, i32) {
    %c0_i32 = arith.constant 0 : i32
    %c0_i32_0 = arith.constant 0 : i32
    %c0_i32_1 = arith.constant 0 : i32
    return %c0_i32, %c0_i32_0 : i32, i32
  }
  func.func @transform_2(%arg0: i32) -> (i32, i32) {
    %c0_i32 = arith.constant 0 : i32
    %c0_i32_0 = arith.constant 0 : i32
    %c0_i32_1 = arith.constant 0 : i32
    return %c0_i32, %c0_i32_0 : i32, i32
  }
  func.func @transform_3(%arg0: i32) -> (i32, i32) {
    %c0_i32 = arith.constant 0 : i32
    %c0_i32_0 = arith.constant 0 : i32
    %c0_i32_1 = arith.constant 0 : i32
    return %c0_i32, %c0_i32_0 : i32, i32
  }
  func.func @transform_4(%arg0: i32) -> (i32, i32) {
    %c0_i32 = arith.constant 0 : i32
    %c0_i32_0 = arith.constant 0 : i32
    %c0_i32_1 = arith.constant 0 : i32
    return %c0_i32, %c0_i32_0 : i32, i32
  }
  func.func @transform_5(%arg0: i32) -> (i32, i32) {
    %c0_i32 = arith.constant 0 : i32
    %c0_i32_0 = arith.constant 0 : i32
    return %c0_i32, %arg0 : i32, i32
  }
}

</mosaic_0001>

<llo_original>
// kernel: neural_net1_forward.1
$region0: #{neural_net1_forward.1}
  #allocation0 [shape = 'u32[]', space=smem, size = 0x4, offset = 0x4, fixed_abs, tag = 'smem constant byte address 0x4 - core index']
  #allocation1 [shape = 'u32[72,128]{1,0:T(1,128)}', space=vmem, size = 0x9000, scoped, tag = 'internal scratch']
  #allocation2 [shape = 'f32[1,1]{1,0:T(1,128)S(1)}', space=vmem, size = 0x200, scoped, tag = 'scoped memory for neural_net1_forward.1']
  %s0 = inlined_call_operand.vmem [shape: bf16[128,32], index: 0, kind: input, shape index: {}]
  %s1 = inlined_call_operand.vmem [shape: bf16[32,128], index: 1, kind: input, shape index: {}]
  %s2 = inlined_call_operand.vmem [shape: f32[1,128], index: 2, kind: input, shape index: {}]
  %s3 = inlined_call_operand.vmem [shape: f32[8,128], index: 3, kind: input, shape index: {}]
  %s4 = inlined_call_operand.<no memory space> [shape: f32[1,1], index: 4, kind: input, shape index: {}]
  %s5 = inlined_call_operand.vmem [shape: f32[1,128], index: 5, kind: output, shape index: {}]
  %s6 = sld [smem:[#allocation0]]
  $region30: #{neural_net1_forward.1} parent=0
    _
  %s8 = ssub.s32 1, %s6
  %s9 = scalar_select 0, %s8, %s6
  %v10 = vstv %s4
  %11 = vst [vmem:[#allocation2] sm:$0x1] %v10
  // Predicated region
  $region2: #{neural_net1_forward.1} parent=0 // pred_check
    _
  $region3: #{neural_net1_forward.1} parent=0 // pred_check_branch
    %13 = sbr.rel (0) target = $region5
  $region4: #{neural_net1_forward.1} parent=0 // pred_region
    _
  $region5: #{neural_net1_forward.1} parent=0 // pred_fallthru
    _
  // Predicated region
  $region6: #{neural_net1_forward.1} parent=0 // pred_check
    _
  $region7: #{neural_net1_forward.1} parent=0 // pred_check_branch
    %15 = sbr.rel (0) target = $region9
  $region8: #{neural_net1_forward.1} parent=0 // pred_region
    _
  $region9: #{neural_net1_forward.1} parent=0 // pred_fallthru
    _
  // Predicated region
  $region10: #{neural_net1_forward.1} parent=0 // pred_check
    _
  $region11: #{neural_net1_forward.1} parent=0 // pred_check_branch
    %17 = sbr.rel (0) target = $region13
  $region12: #{neural_net1_forward.1} parent=0 // pred_region
    _
  $region13: #{neural_net1_forward.1} parent=0 // pred_fallthru
    _
  // Predicated region
  $region14: #{neural_net1_forward.1} parent=0 // pred_check
    _
  $region15: #{neural_net1_forward.1} parent=0 // pred_check_branch
    %19 = sbr.rel (0) target = $region17
  $region16: #{neural_net1_forward.1} parent=0 // pred_region
    _
  $region17: #{neural_net1_forward.1} parent=0 // pred_fallthru
    _
  // Predicated region
  $region18: #{neural_net1_forward.1} parent=0 // pred_check
    _
  $region19: #{neural_net1_forward.1} parent=0 // pred_check_branch
    %21 = sbr.rel (0) target = $region21
  $region20: #{neural_net1_forward.1} parent=0 // pred_region
    _
  $region21: #{neural_net1_forward.1} parent=0 // pred_fallthru
    _
  %v23 = vld [vmem:[%s0] sm:$0xf]
  %v24 = vld [vmem:[%s0 + $0x4] sm:$0xf]
  %v25 = vld [vmem:[%s0 + $0x8] sm:$0xf]
  %v26 = vld [vmem:[%s0 + $0xc] sm:$0xf]
  %v27 = vld [vmem:[%s0 + $0x10] sm:$0xf]
  %v28 = vld [vmem:[%s0 + $0x14] sm:$0xf]
  %v29 = vld [vmem:[%s0 + $0x18] sm:$0xf]
  %v30 = vld [vmem:[%s0 + $0x1c] sm:$0xf]
  %v31 = vld [vmem:[%s0 + $0x20] sm:$0xf]
  %v32 = vld [vmem:[%s0 + $0x24] sm:$0xf]
  %v33 = vld [vmem:[%s0 + $0x28] sm:$0xf]
  %v34 = vld [vmem:[%s0 + $0x2c] sm:$0xf]
  %v35 = vld [vmem:[%s0 + $0x30] sm:$0xf]
  %v36 = vld [vmem:[%s0 + $0x34] sm:$0xf]
  %v37 = vld [vmem:[%s0 + $0x38] sm:$0xf]
  %v38 = vld [vmem:[%s0 + $0x3c] sm:$0xf]
  %v39 = vld [vmem:[%s1] sm:$0xf]
  %v40 = vld [vmem:[%s1 + $0x4] sm:$0xf]
  %v41 = vld [vmem:[%s1 + $0x8] sm:$0xf]
  %v42 = vld [vmem:[%s1 + $0xc] sm:$0xf]
  %v43 = vld [vmem:[%s2] sm:$0x1]
  %v45 = vperm.slane %v43, 0
  %v63 = vunpack.c.l.b16 %v23
  %v64 = vunpack.c.l.b16 %v24
  %v65 = vunpack.c.l.b16 %v25
  %v66 = vunpack.c.l.b16 %v26
  %v67 = vunpack.c.l.b16 %v27
  %v68 = vunpack.c.l.b16 %v28
  %v69 = vunpack.c.l.b16 %v29
  %v70 = vunpack.c.l.b16 %v30
  %v71 = vunpack.c.l.b16 %v31
  %v72 = vunpack.c.l.b16 %v32
  %v73 = vunpack.c.l.b16 %v33
  %v74 = vunpack.c.l.b16 %v34
  %v75 = vunpack.c.l.b16 %v35
  %v76 = vunpack.c.l.b16 %v36
  %v77 = vunpack.c.l.b16 %v37
  %v78 = vunpack.c.l.b16 %v38
  %v79 = vpack.c.b16 %v64, %v63
  %v80 = vpack.c.b16 %v66, %v65
  %v81 = vpack.c.b16 %v68, %v67
  %v82 = vpack.c.b16 %v70, %v69
  %v83 = vpack.c.b16 %v72, %v71
  %v84 = vpack.c.b16 %v74, %v73
  %v85 = vpack.c.b16 %v76, %v75
  %v86 = vpack.c.b16 %v78, %v77
  %v91 = vunpack.c.l.b16 %v39
  %v92 = vunpack.c.l.b16 %v40
  %v93 = vunpack.c.l.b16 %v41
  %v94 = vunpack.c.l.b16 %v42
  %v95 = vpack.c.b16 %v92, %v91
  %v96 = vpack.c.b16 %v94, %v93
  %vm99 = vcmask 261120
  %v101 = vsel %vm99, %v79, 0
  %v104 = vsel %vm99, %v80, 0
  %v107 = vsel %vm99, %v81, 0
  %v110 = vsel %vm99, %v82, 0
  %v113 = vsel %vm99, %v83, 0
  %v116 = vsel %vm99, %v84, 0
  %v119 = vsel %vm99, %v85, 0
  %v122 = vsel %vm99, %v86, 0
  %124 = vmatpush.bf16.msra.mxu0 0
  %125 = vmatpush.bf16.msra.mxu0 0
  %126 = vmatpush.bf16.msra.mxu0 0
  %127 = vmatpush.bf16.msra.mxu0 0
  %128 = vmatpush.bf16.msra.mxu0 0
  %129 = vmatpush.bf16.msra.mxu0 0
  %130 = vmatpush.bf16.msra.mxu0 %v96
  %131 = vmatpush.bf16.msra.mxu0 %v95
  %132 = vmatmul.bf16.gmra.mxu0 %v101
  %v133 = vpop.f32.mrf.mxu0
  %v134 = vadd.f32 %v45, %v133
  %v135 = vpop.f32.mrf.mxu0
  %v136 = vadd.f32 %v45, %v135
  %137 = vmatmul.bf16.gmra.mxu0 %v104
  %v138 = vpop.f32.mrf.mxu0
  %v139 = vadd.f32 %v45, %v138
  %v140 = vpop.f32.mrf.mxu0
  %v141 = vadd.f32 %v45, %v140
  %142 = vmatmul.bf16.gmra.mxu0 %v107
  %v143 = vpop.f32.mrf.mxu0
  %v144 = vadd.f32 %v45, %v143
  %v145 = vpop.f32.mrf.mxu0
  %v146 = vadd.f32 %v45, %v145
  %147 = vmatmul.bf16.gmra.mxu0 %v110
  %v148 = vpop.f32.mrf.mxu0
  %v149 = vadd.f32 %v45, %v148
  %v150 = vpop.f32.mrf.mxu0
  %v151 = vadd.f32 %v45, %v150
  %152 = vmatmul.bf16.gmra.mxu0 %v113
  %v153 = vpop.f32.mrf.mxu0
  %v154 = vadd.f32 %v45, %v153
  %v155 = vpop.f32.mrf.mxu0
  %v156 = vadd.f32 %v45, %v155
  %157 = vmatmul.bf16.gmra.mxu0 %v116
  %v158 = vpop.f32.mrf.mxu0
  %v159 = vadd.f32 %v45, %v158
  %v160 = vpop.f32.mrf.mxu0
  %v161 = vadd.f32 %v45, %v160
  %162 = vmatmul.bf16.gmra.mxu0 %v119
  %v163 = vpop.f32.mrf.mxu0
  %v164 = vadd.f32 %v45, %v163
  %v165 = vpop.f32.mrf.mxu0
  %v166 = vadd.f32 %v45, %v165
  %167 = vmatmul.bf16.gmra.mxu0 %v122
  %v168 = vpop.f32.mrf.mxu0
  %v169 = vadd.f32 %v45, %v168
  %v170 = vpop.f32.mrf.mxu0
  %v171 = vadd.f32 %v45, %v170
  %172 = vdwg.mxu0
  %v173 = vmax.f32 %v134, 0.0
  %v174 = vmax.f32 %v136, 0.0
  %v175 = vmax.f32 %v139, 0.0
  %v176 = vmax.f32 %v141, 0.0
  %v177 = vmax.f32 %v144, 0.0
  %v178 = vmax.f32 %v146, 0.0
  %v179 = vmax.f32 %v149, 0.0
  %v180 = vmax.f32 %v151, 0.0
  %v181 = vmax.f32 %v154, 0.0
  %v182 = vmax.f32 %v156, 0.0
  %v183 = vmax.f32 %v159, 0.0
  %v184 = vmax.f32 %v161, 0.0
  %v185 = vmax.f32 %v164, 0.0
  %v186 = vmax.f32 %v166, 0.0
  %v187 = vmax.f32 %v169, 0.0
  %v188 = vmax.f32 %v171, 0.0
  %v189 = vld [vmem:[%s3] sm:$0xff]
  %190 = vmatpush.xpose.msra.mxu0 %v188
  %191 = vmatpush.xpose.msra.mxu0 %v187
  %192 = vmatpush.xpose.msra.mxu0 %v186
  %193 = vmatpush.xpose.msra.mxu0 %v185
  %194 = vmatpush.xpose.msra.mxu0 %v184
  %195 = vmatpush.xpose.msra.mxu0 %v183
  %196 = vmatpush.xpose.msra.mxu0 %v182
  %197 = vmatpush.xpose.msra.mxu0 %v181
  %198 = vmatpush.xpose.msra.mxu0 %v180
  %199 = vmatpush.xpose.msra.mxu0 %v179
  %200 = vmatpush.xpose.msra.mxu0 %v178
  %201 = vmatpush.xpose.msra.mxu0 %v177
  %202 = vmatpush.xpose.msra.mxu0 %v176
  %203 = vmatpush.xpose.msra.mxu0 %v175
  %204 = vmatpush.xpose.msra.mxu0 %v174
  %205 = vmatpush.xpose.msra.mxu0 %v173
  %206 = vmatmul.f32.gmra.mxu0 %v189
  %v207 = vpop.f32.mrf.mxu0
  %v208 = vadd.f32 0.0, %v207
  %209 = vdwg.mxu0
  %v210 = vld [vmem:[#allocation2] sm:$0x1]
  %212 = vset.pattern.permute.xlu0 0
  %213 = vperm.xlu0 %212, %v210
  %v214 = vpop.permute.xlu0 %213
  %v216 = vperm.slane %v214, 0
  %v217 = vadd.f32 %v208, %v216
  %v218 = vsub.f32 0.0, %v217
  %v219 = vmul.f32 %v218, 1.442695
  %v220 = vpow.pop %v219
  %v221 = vadd.f32 %v220, 1.0
  %v222 = vrcp.pop %v221
  %223 = vst [vmem:[%s5] sm:$0x1] %v222
  // Predicated region
  $region22: #{neural_net1_forward.1} parent=0 // pred_check
    _
  $region23: #{neural_net1_forward.1} parent=0 // pred_check_branch
    %225 = sbr.rel (0) target = $region25
  $region24: #{neural_net1_forward.1} parent=0 // pred_region
    _
  $region25: #{neural_net1_forward.1} parent=0 // pred_fallthru
    _
  // Predicated region
  $region26: #{neural_net1_forward.1} parent=0 // pred_check
    _
  $region27: #{neural_net1_forward.1} parent=0 // pred_check_branch
    %227 = sbr.rel (0) target = $region29
  $region28: #{neural_net1_forward.1} parent=0 // pred_region
    _
  $region29: #{neural_net1_forward.1} parent=0 // pred_fallthru
    _

</llo_original>
